<compile_context>
chip_gen: v5e
topology: v5e:2x2
jax: 0.10.0
libtpu: 0.0.40
codegen_flags: <defaults>
</compile_context>

<pallas_src>
import functools

import jax
import jax.numpy as jnp
from jax import lax
from jax.experimental import pallas as pl
from jax.experimental.pallas import tpu as pltpu


# ---------------------------------------------------------------------------
# Kernel 1: noise MLP (Linear -> ReLU -> Linear) + positional embedding.
# grid = (K, J): k tiles the hidden/contraction dim of the second matmul,
# j tiles its output columns.  The (B, Dout) f32 output stays resident in
# VMEM (constant block index) and is accumulated in place; the hidden panel
# h_k is computed once per k (at j == 0), so w1/b1/w2 stream from HBM once.
# ---------------------------------------------------------------------------
def _noise_mlp_kernel(noise_ref, w1_ref, b1_ref, w2_ref, peb2_ref,
                      o_ref, h_ref):
    k = pl.program_id(0)
    j = pl.program_id(1)
    tj = w2_ref.shape[1]

    @pl.when(j == 0)
    def _():
        # hidden column panel: relu(noise @ w1[:, k-panel] + b1[k-panel])
        h = jnp.dot(noise_ref[...].astype(jnp.bfloat16), w1_ref[...],
                    preferred_element_type=jnp.float32) + b1_ref[...]
        h_ref[...] = jnp.maximum(h, 0.0)

    contrib = jnp.dot(h_ref[...].astype(jnp.bfloat16), w2_ref[...],
                      preferred_element_type=jnp.float32)
    jcols = pl.ds(j * tj, tj)

    @pl.when(k == 0)
    def _():
        o_ref[:, jcols] = contrib

    @pl.when(k > 0)
    def _():
        o_ref[:, jcols] = o_ref[:, jcols] + contrib

    @pl.when(k == pl.num_programs(0) - 1)
    def _():
        # fold in (second-linear bias + positional embedding), pre-summed.
        o_ref[:, jcols] = o_ref[:, jcols] + peb2_ref[:, jcols]


# ---------------------------------------------------------------------------
# Kernel 2: transformer encoder stack + fused gumbel-softmax epilogue.
# grid = (batch-chunk, block); the (bt*P, E) activation slab lives in VMEM
# scratch across the sequential block axis, matmul M = bt*P.
# ---------------------------------------------------------------------------
def _layernorm(h, g, b, eps=1e-5):
    mu = jnp.mean(h, axis=-1, keepdims=True)
    var = jnp.mean(jnp.square(h - mu), axis=-1, keepdims=True)
    return (h - mu) * lax.rsqrt(var + eps) * g + b


def _softmax_last(s):
    s = s - jnp.max(s, axis=-1, keepdims=True)
    e = jnp.exp(s)
    return e * pl.reciprocal(jnp.sum(e, axis=-1, keepdims=True), approx=True)


def _tr_stack_kernel(x_ref, g_ref, wqkv_ref, wo_ref, w1_ref, w2_ref, vec_ref,
                     o_ref, act_ref, *, n_heads, tau):
    l = pl.program_id(1)
    bt, p_len, e = x_ref.shape
    hdim = w1_ref.shape[-1]
    hd = e // n_heads
    scale = 1.0 / (hd ** 0.5)
    m = bt * p_len

    # unpack the per-block bias / LayerNorm vectors (one DMA per step).
    vp = vec_ref[0]                                   # (1, 9E + Hdim) f32
    bqkv = vp[:, 0:3 * e]
    bo = vp[:, 3 * e:4 * e]
    ln1g = vp[:, 4 * e:5 * e]
    ln1b = vp[:, 5 * e:6 * e]
    b1 = vp[:, 6 * e:6 * e + hdim]
    b2 = vp[:, 6 * e + hdim:7 * e + hdim]
    ln2g = vp[:, 7 * e + hdim:8 * e + hdim]
    ln2b = vp[:, 8 * e + hdim:9 * e + hdim]

    @pl.when(l == 0)
    def _():
        act_ref[...] = x_ref[...].reshape(m, e)

    x2 = act_ref[...]                                 # (bt*P, E) f32 residual
    xb = x2.astype(jnp.bfloat16)

    # fused QKV projection: one batch-packed (bt*P, E) @ (E, 3E) matmul.
    qkv = jnp.dot(xb, wqkv_ref[0],
                  preferred_element_type=jnp.float32) + bqkv      # (bt*P, 3E)

    # multi-head self-attention over positions, batched over the bt chunk.
    # TODO(synk): per-head Python loop kept (n_heads is small); a fully
    #             head-batched dot_general would need an in-kernel 4-D transpose.
    ctx_heads = []
    for h in range(n_heads):
        qh = qkv[:, h * hd:(h + 1) * hd].reshape(bt, p_len, hd)
        kh = qkv[:, e + h * hd:e + (h + 1) * hd].reshape(bt, p_len, hd)
        vh = qkv[:, 2 * e + h * hd:2 * e + (h + 1) * hd].reshape(bt, p_len, hd)
        s = jnp.einsum('bqd,bkd->bqk', qh.astype(jnp.bfloat16),
                       kh.astype(jnp.bfloat16),
                       preferred_element_type=jnp.float32) * scale
        p = _softmax_last(s)
        ctx_heads.append(jnp.einsum('bqk,bkd->bqd', p.astype(jnp.bfloat16),
                                    vh.astype(jnp.bfloat16),
                                    preferred_element_type=jnp.float32))
    ctx = jnp.concatenate(ctx_heads, axis=-1).reshape(m, e)       # (bt*P, E)

    # single full-E output projection (heads folded into the K dim).
    attn = jnp.dot(ctx.astype(jnp.bfloat16), wo_ref[0],
                   preferred_element_type=jnp.float32) + bo

    h1 = _layernorm(x2 + attn, ln1g, ln1b)

    ff = jnp.dot(h1.astype(jnp.bfloat16), w1_ref[0],
                 preferred_element_type=jnp.float32) + b1
    ff = jnp.maximum(ff, 0.0)
    ff = jnp.dot(ff.astype(jnp.bfloat16), w2_ref[0],
                 preferred_element_type=jnp.float32) + b2

    h2 = _layernorm(h1 + ff, ln2g, ln2b)
    act_ref[...] = h2

    @pl.when(l == pl.num_programs(1) - 1)
    def _():
        # gumbel-softmax over the channel (E) dim, fused into the epilogue.
        g = g_ref[...].reshape(m, e)
        y = (h2 + g) * (1.0 / tau)
        y = y - jnp.max(y, axis=-1, keepdims=True)
        ey = jnp.exp(y)
        z = ey / jnp.sum(ey, axis=-1, keepdims=True)   # exact normalization
        o_ref[...] = z.reshape(bt, p_len, e).astype(o_ref.dtype)


# ---------------------------------------------------------------------------
# Parameter construction + forward wrapper
# ---------------------------------------------------------------------------
def _normal(key, shape, scale=0.02):
    return scale * jax.random.normal(key, shape, dtype=jnp.float32)


def _pick_tile(n):
    for t in (512, 256, 128):
        if n % t == 0:
            return t
    return n


def _pick_bt(batch, p):
    # Largest divisor of `batch` whose chunk fills ~256 MXU rows (bt*P ~ 256);
    # NB = batch // bt becomes >= 2 automatically for large batches (keeps both
    # v7x TensorCores busy); tiny demo batches favor M-packing over the split.
    target = max(1, -(-256 // p))
    bt = 1
    for d in range(1, batch + 1):
        if batch % d == 0 and d <= target:
            bt = d
    return bt


class Generator:
    def __init__(self, noise_dim, hidden_width, hidden_height, embedding_dim,
                 num_blocks, n_attn_heads, hidden_dim, dropout_prob,
                 num_latent_positions, *, key):
        assert hidden_width * hidden_height == num_latent_positions
        assert embedding_dim % n_attn_heads == 0
        assert num_blocks >= 1
        self.noise_dim = noise_dim
        self.W, self.H = hidden_width, hidden_height
        self.E = embedding_dim
        self.P = num_latent_positions
        self.n_heads = n_attn_heads
        self.Hdim = hidden_dim
        self.num_blocks = num_blocks
        del dropout_prob  # identity at inference

        E, P, L, Hdim = self.E, self.P, num_blocks, hidden_dim
        Dout = E * P
        keys = iter(jax.random.split(key, 3 + 6 * L))

        # learned positional embedding, pre-folded with the (zero) second
        # linear bias of the noise MLP into one resident vector.
        self.pe = _normal(next(keys), (P, E))
        self.peb2 = self.pe.reshape(1, Dout) + jnp.zeros((1, Dout), jnp.float32)

        # noise MLP weights (bf16 for the MXU, biases f32)
        self.mlp_w1 = _normal(next(keys), (noise_dim, Dout)).astype(jnp.bfloat16)
        self.mlp_b1 = jnp.zeros((1, Dout), jnp.float32)
        self.mlp_w2 = _normal(next(keys), (Dout, Dout)).astype(jnp.bfloat16)

        # transformer encoder blocks: weights stacked along a leading block
        # dim so a single gridded pallas_call streams each of them once.
        wqkv, wo, w1, w2 = [], [], [], []
        for _ in range(L):
            wq = _normal(next(keys), (E, E))
            wk = _normal(next(keys), (E, E))
            wv = _normal(next(keys), (E, E))
            wqkv.append(jnp.concatenate([wq, wk, wv], axis=1))      # (E, 3E)
            wo.append(_normal(next(keys), (E, E)))
            w1.append(_normal(next(keys), (E, Hdim)))
            w2.append(_normal(next(keys), (Hdim, E)))
        self.wqkv = jnp.stack(wqkv).astype(jnp.bfloat16)            # (L, E, 3E)
        self.wo = jnp.stack(wo).astype(jnp.bfloat16)                # (L, E, E)
        self.ffn_w1 = jnp.stack(w1).astype(jnp.bfloat16)            # (L, E, Hdim)
        self.ffn_w2 = jnp.stack(w2).astype(jnp.bfloat16)            # (L, Hdim, E)

        # 8 tiny per-block vectors packed into one (L, 1, 9E + Hdim) tensor:
        # [bqkv(3E)|bo(E)|ln1_g(E)|ln1_b(E)|b1(Hdim)|b2(E)|ln2_g(E)|ln2_b(E)]
        one_blk = jnp.concatenate([
            jnp.zeros((3 * E,), jnp.float32),   # qkv bias
            jnp.zeros((E,), jnp.float32),       # out-proj bias
            jnp.ones((E,), jnp.float32),        # LN1 gamma
            jnp.zeros((E,), jnp.float32),       # LN1 beta
            jnp.zeros((Hdim,), jnp.float32),    # FFN bias 1
            jnp.zeros((E,), jnp.float32),       # FFN bias 2
            jnp.ones((E,), jnp.float32),        # LN2 gamma
            jnp.zeros((E,), jnp.float32),       # LN2 beta
        ])
        self.vec_pack = jnp.tile(one_blk[None, None, :], (L, 1, 1))

    def __call__(self, noise, *, gumbel_seed=0, tau=1.0 / 16, hard=False):
        B = noise.shape[0]
        P, E, L = self.P, self.E, self.num_blocks
        Hdim, nd, n_heads = self.Hdim, self.noise_dim, self.n_heads
        Dout = P * E
        hd = E // n_heads

        # ---- noise MLP + positional embedding (Pallas) -------------------
        tj = _pick_tile(Dout)
        tk = _pick_tile(Dout)
        ce_mlp = pl.CostEstimate(
            flops=2 * B * nd * Dout + 2 * B * Dout * Dout,
            transcendentals=0,
            bytes_accessed=2 * (nd * Dout + Dout * Dout)
                           + 4 * (B * nd + 2 * Dout + B * Dout))
        codes = pl.pallas_call(
            _noise_mlp_kernel,
            out_shape=jax.ShapeDtypeStruct((B, Dout), jnp.float32),
            grid_spec=pltpu.PrefetchScalarGridSpec(
                num_scalar_prefetch=0,
                grid=(Dout // tk, Dout // tj),
                in_specs=[
                    pl.BlockSpec((B, nd), lambda k, j: (0, 0)),         # noise
                    pl.BlockSpec((nd, tk), lambda k, j: (0, k)),        # w1
                    pl.BlockSpec((1, tk), lambda k, j: (0, k)),         # b1
                    pl.BlockSpec((tk, tj), lambda k, j: (k, j)),        # w2
                    pl.BlockSpec((1, Dout), lambda k, j: (0, 0)),       # pe+b2
                ],
                out_specs=pl.BlockSpec((B, Dout), lambda k, j: (0, 0)),  # resident
                scratch_shapes=[pltpu.VMEM((B, tk), jnp.float32)],
            ),
            compiler_params=pltpu.CompilerParams(
                # j==0 / k==0 phase gates require strictly sequential order.
                dimension_semantics=("arbitrary", "arbitrary"),
                vmem_limit_bytes=64 * 1024 * 1024),
            cost_estimate=ce_mlp,
        )(noise, self.mlp_w1, self.mlp_b1, self.mlp_w2, self.peb2)

        x = codes.reshape(B, P, E)

        # gumbel noise from jax.random (runs on any backend).
        # TODO(synk): torch RNG stream not reproduced; same distribution.
        g = jax.random.gumbel(jax.random.PRNGKey(gumbel_seed), (B, P, E),
                              dtype=jnp.float32)

        # ---- transformer stack + fused gumbel-softmax (single call) ------
        bt = _pick_bt(B, P)
        nb = B // bt
        act_map = lambda b, l: (b, 0, 0)
        blk_map = lambda b, l: (l, 0, 0)
        kernel = functools.partial(_tr_stack_kernel, n_heads=n_heads, tau=tau)
        ce_tr = pl.CostEstimate(
            flops=L * (2 * B * P * E * 3 * E + 4 * B * n_heads * P * P * hd
                       + 2 * B * P * E * E + 4 * B * P * E * Hdim),
            transcendentals=L * B * n_heads * P * P + B * P * E,
            bytes_accessed=2 * L * (4 * E * E + 2 * E * Hdim)
                           + 4 * L * (9 * E + Hdim) + 4 * 3 * B * P * E)
        z_soft = pl.pallas_call(
            kernel,
            out_shape=jax.ShapeDtypeStruct((B, P, E), jnp.float32),
            grid_spec=pltpu.PrefetchScalarGridSpec(
                num_scalar_prefetch=0,
                grid=(nb, L),
                in_specs=[
                    pl.BlockSpec((bt, P, E), act_map),                  # x
                    pl.BlockSpec((bt, P, E), act_map),                  # gumbel
                    pl.BlockSpec((1, E, 3 * E), blk_map),               # wqkv
                    pl.BlockSpec((1, E, E), blk_map),                   # wo
                    pl.BlockSpec((1, E, Hdim), blk_map),                # ffn w1
                    pl.BlockSpec((1, Hdim, E), blk_map),                # ffn w2
                    pl.BlockSpec((1, 1, 9 * E + Hdim), blk_map),        # biases/LN
                ],
                out_specs=pl.BlockSpec((bt, P, E), act_map),
                scratch_shapes=[pltpu.VMEM((bt * P, E), jnp.float32)],
            ),
            compiler_params=pltpu.CompilerParams(
                dimension_semantics=("parallel", "arbitrary"),
                vmem_limit_bytes=64 * 1024 * 1024),
            cost_estimate=ce_tr,
        )(x, g, self.wqkv, self.wo, self.ffn_w1, self.ffn_w2, self.vec_pack)

        if hard:
            # straight-through one-hot (forward = one-hot, grad through soft)
            idx = jnp.argmax(z_soft, axis=-1)
            z_hard = jax.nn.one_hot(idx, E, dtype=z_soft.dtype)
            z_soft = z_hard + (z_soft - lax.stop_gradient(z_soft))

        # (B, P, E) -> (B, E, P) -> (B, E, W, H)  (tiny rearrangement in XLA)
        return z_soft.transpose(0, 2, 1).reshape(B, E, self.W, self.H)


if __name__ == "__main__":
    key = jax.random.PRNGKey(0)
    k_params, k_noise = jax.random.split(key, 2)

    B = 2
    noise_dim = 16
    hidden_width = hidden_height = 4
    embedding_dim = 32
    num_blocks = 2
    n_attn_heads = 4
    hidden_dim = 64
    dropout_prob = 0.1
    num_latent_positions = hidden_width * hidden_height  # 16

    gen = Generator(noise_dim, hidden_width, hidden_height, embedding_dim,
                    num_blocks, n_attn_heads, hidden_dim, dropout_prob,
                    num_latent_positions, key=k_params)

    noise = jax.random.normal(k_noise, (B, noise_dim), dtype=jnp.float32)

    z = gen(noise, gumbel_seed=1234, tau=1.0 / 16, hard=False)
    z = jax.block_until_ready(z)
    assert z.shape == (B, embedding_dim, hidden_width, hidden_height)
    # gumbel-softmax output is a distribution over channels at each (b, w, h)
    assert bool(jnp.allclose(z.sum(axis=1), 1.0, atol=1e-3))

    z_hard = jax.block_until_ready(gen(noise, gumbel_seed=1234, hard=True))
    assert bool(jnp.allclose(z_hard.sum(axis=1), 1.0, atol=1e-3))

    print("KERNEL_OK")
</pallas_src>

<mosaic_0001>
module attributes {stable_mosaic.version = 11 : i64} {
  func.func @_noise_mlp_kernel(%arg0: i32, %arg1: i32, %arg2: memref<2x16xf32, #tpu.memory_space<vmem>>, %arg3: memref<16x512xbf16, #tpu.memory_space<vmem>>, %arg4: memref<1x512xf32, #tpu.memory_space<vmem>>, %arg5: memref<512x512xbf16, #tpu.memory_space<vmem>>, %arg6: memref<1x512xf32, #tpu.memory_space<vmem>>, %arg7: memref<2x512xf32, #tpu.memory_space<vmem>>, %arg8: memref<2x512xf32, #tpu.memory_space<vmem>>) attributes {dimension_semantics = [#tpu.dimension_semantics<arbitrary>, #tpu.dimension_semantics<arbitrary>], iteration_bounds = array<i64: 1, 1>, scalar_prefetch = 0 : i64, scratch_operands = 1 : i64, tpu.core_type = #tpu.core_type<tc>, window_params = [{pipeline_mode = #tpu.pipeline_mode<synchronous>, transform_indices = @transform_0, window_bounds = array<i64: 2, 16>}, {transform_indices = @transform_1, window_bounds = array<i64: 16, 512>}, {transform_indices = @transform_2, window_bounds = array<i64: 1, 512>}, {transform_indices = @transform_3, window_bounds = array<i64: 512, 512>}, {pipeline_mode = #tpu.pipeline_mode<synchronous>, transform_indices = @transform_4, window_bounds = array<i64: 1, 512>}, {pipeline_mode = #tpu.pipeline_mode<synchronous>, transform_indices = @transform_5, window_bounds = array<i64: 2, 512>}]} {
    %c0_i32 = arith.constant 0 : i32
    %0 = arith.cmpi eq, %arg1, %c0_i32 : i32
    %1 = arith.extui %0 : i1 to i32
    %c0_i32_0 = arith.constant 0 : i32
    %2 = arith.cmpi ne, %1, %c0_i32_0 : i32
    scf.if %2 {
      %c0_10 = arith.constant 0 : index
      %c0_11 = arith.constant 0 : index
      %17 = vector.load %arg2[%c0_10, %c0_11] : memref<2x16xf32, #tpu.memory_space<vmem>>, vector<2x16xf32>
      %18 = arith.truncf %17 : vector<2x16xf32> to vector<2x16xbf16>
      %c0_12 = arith.constant 0 : index
      %c0_13 = arith.constant 0 : index
      %19 = vector.load %arg3[%c0_12, %c0_13] : memref<16x512xbf16, #tpu.memory_space<vmem>>, vector<16x512xbf16>
      %cst_14 = arith.constant dense<0.000000e+00> : vector<2x512xf32>
      %20 = tpu.matmul %18, %19, %cst_14 {dimension_numbers = #tpu.dot_dimension_numbers<[1], [0], [0], [1], [0, 0, 1, 1], [], []>} : vector<2x16xbf16>, vector<16x512xbf16>, vector<2x512xf32> -> vector<2x512xf32>
      %c0_15 = arith.constant 0 : index
      %c0_16 = arith.constant 0 : index
      %21 = vector.load %arg4[%c0_15, %c0_16] : memref<1x512xf32, #tpu.memory_space<vmem>>, vector<1x512xf32>
      %22 = vector.broadcast %21 : vector<1x512xf32> to vector<2x512xf32>
      %23 = arith.addf %20, %22 : vector<2x512xf32>
      %cst_17 = arith.constant 0.000000e+00 : f32
      %24 = vector.broadcast %cst_17 : f32 to vector<2x512xf32>
      %25 = arith.maximumf %23, %24 : vector<2x512xf32>
      %c0_18 = arith.constant 0 : index
      %c0_19 = arith.constant 0 : index
      %26 = vector.load %arg8[%c0_18, %c0_19] : memref<2x512xf32, #tpu.memory_space<vmem>>, vector<2x512xf32>
      tpu.vector_store %arg8[%c0_18, %c0_19], %25 {strides = array<i32>} : memref<2x512xf32, #tpu.memory_space<vmem>>, vector<2x512xf32>,
    } else {
    }
    %c0 = arith.constant 0 : index
    %c0_1 = arith.constant 0 : index
    %3 = vector.load %arg8[%c0, %c0_1] : memref<2x512xf32, #tpu.memory_space<vmem>>, vector<2x512xf32>
    %4 = arith.truncf %3 : vector<2x512xf32> to vector<2x512xbf16>
    %c0_2 = arith.constant 0 : index
    %c0_3 = arith.constant 0 : index
    %5 = vector.load %arg5[%c0_2, %c0_3] : memref<512x512xbf16, #tpu.memory_space<vmem>>, vector<512x512xbf16>
    %cst = arith.constant dense<0.000000e+00> : vector<2x512xf32>
    %6 = tpu.matmul %4, %5, %cst {dimension_numbers = #tpu.dot_dimension_numbers<[1], [0], [0], [1], [0, 0, 1, 1], [], []>} : vector<2x512xbf16>, vector<512x512xbf16>, vector<2x512xf32> -> vector<2x512xf32>
    %c512_i32 = arith.constant 512 : i32
    %7 = arith.muli %arg1, %c512_i32 : i32
    %c0_i32_4 = arith.constant 0 : i32
    %8 = arith.cmpi eq, %arg0, %c0_i32_4 : i32
    %9 = arith.extui %8 : i1 to i32
    %c0_i32_5 = arith.constant 0 : i32
    %10 = arith.cmpi ne, %9, %c0_i32_5 : i32
    scf.if %10 {
      %c0_10 = arith.constant 0 : index
      %17 = arith.index_cast %7 : i32 to index
      %18 = vector.load %arg7[%c0_10, %17] : memref<2x512xf32, #tpu.memory_space<vmem>>, vector<2x512xf32>
      tpu.vector_store %arg7[%c0_10, %17], %6 {strides = array<i32>} : memref<2x512xf32, #tpu.memory_space<vmem>>, vector<2x512xf32>,
    } else {
    }
    %c0_i32_6 = arith.constant 0 : i32
    %11 = arith.cmpi sgt, %arg0, %c0_i32_6 : i32
    %12 = arith.extui %11 : i1 to i32
    %c0_i32_7 = arith.constant 0 : i32
    %13 = arith.cmpi ne, %12, %c0_i32_7 : i32
    scf.if %13 {
      %c0_10 = arith.constant 0 : index
      %17 = arith.index_cast %7 : i32 to index
      %18 = vector.load %arg7[%c0_10, %17] : memref<2x512xf32, #tpu.memory_space<vmem>>, vector<2x512xf32>
      %19 = arith.addf %18, %6 : vector<2x512xf32>
      %c0_11 = arith.constant 0 : index
      %20 = arith.index_cast %7 : i32 to index
      %21 = vector.load %arg7[%c0_11, %20] : memref<2x512xf32, #tpu.memory_space<vmem>>, vector<2x512xf32>
      tpu.vector_store %arg7[%c0_11, %20], %19 {strides = array<i32>} : memref<2x512xf32, #tpu.memory_space<vmem>>, vector<2x512xf32>,
    } else {
    }
    %c0_i32_8 = arith.constant 0 : i32
    %14 = arith.cmpi eq, %arg0, %c0_i32_8 : i32
    %15 = arith.extui %14 : i1 to i32
    %c0_i32_9 = arith.constant 0 : i32
    %16 = arith.cmpi ne, %15, %c0_i32_9 : i32
    scf.if %16 {
      %c0_10 = arith.constant 0 : index
      %17 = arith.index_cast %7 : i32 to index
      %18 = vector.load %arg7[%c0_10, %17] : memref<2x512xf32, #tpu.memory_space<vmem>>, vector<2x512xf32>
      %c0_11 = arith.constant 0 : index
      %19 = arith.index_cast %7 : i32 to index
      %20 = vector.load %arg6[%c0_11, %19] : memref<1x512xf32, #tpu.memory_space<vmem>>, vector<1x512xf32>
      %21 = vector.broadcast %20 : vector<1x512xf32> to vector<2x512xf32>
      %22 = arith.addf %18, %21 : vector<2x512xf32>
      %c0_12 = arith.constant 0 : index
      %23 = arith.index_cast %7 : i32 to index
      %24 = vector.load %arg7[%c0_12, %23] : memref<2x512xf32, #tpu.memory_space<vmem>>, vector<2x512xf32>
      tpu.vector_store %arg7[%c0_12, %23], %22 {strides = array<i32>} : memref<2x512xf32, #tpu.memory_space<vmem>>, vector<2x512xf32>,
    } else {
    }
    return
  }
  func.func @transform_0(%arg0: i32, %arg1: i32) -> (i32, i32) {
    %c0_i32 = arith.constant 0 : i32
    %c0_i32_0 = arith.constant 0 : i32
    %c0_i32_1 = arith.constant 0 : i32
    return %c0_i32, %c0_i32_0 : i32, i32
  }
  func.func @transform_1(%arg0: i32, %arg1: i32) -> (i32, i32) {
    %c0_i32 = arith.constant 0 : i32
    %c0_i32_0 = arith.constant 0 : i32
    return %c0_i32, %arg0 : i32, i32
  }
  func.func @transform_2(%arg0: i32, %arg1: i32) -> (i32, i32) {
    %c0_i32 = arith.constant 0 : i32
    %c0_i32_0 = arith.constant 0 : i32
    return %c0_i32, %arg0 : i32, i32
  }
  func.func @transform_3(%arg0: i32, %arg1: i32) -> (i32, i32) {
    %c0_i32 = arith.constant 0 : i32
    return %arg0, %arg1 : i32, i32
  }
  func.func @transform_4(%arg0: i32, %arg1: i32) -> (i32, i32) {
    %c0_i32 = arith.constant 0 : i32
    %c0_i32_0 = arith.constant 0 : i32
    %c0_i32_1 = arith.constant 0 : i32
    return %c0_i32, %c0_i32_0 : i32, i32
  }
  func.func @transform_5(%arg0: i32, %arg1: i32) -> (i32, i32) {
    %c0_i32 = arith.constant 0 : i32
    %c0_i32_0 = arith.constant 0 : i32
    %c0_i32_1 = arith.constant 0 : i32
    return %c0_i32, %c0_i32_0 : i32, i32
  }
}

</mosaic_0001>

<llo_original>
// kernel: tpu_custom_call.1
$region0: #{tpu_custom_call.1}
  #allocation0 [shape = 'u32[]', space=smem, size = 0x4, offset = 0x4, fixed_abs, tag = 'smem constant byte address 0x4 - core index']
  #allocation1 [shape = 'u32[72,128]{1,0:T(1,128)}', space=vmem, size = 0x9000, scoped, tag = 'internal scratch']
  #allocation2 [shape = 'f32[2,512]{1,0:T(2,128)}', space=vmem, size = 0x1000, scoped, tag = 'scratch operand']
  %s0 = inlined_call_operand.hbm [shape: f32[2,16], index: 0, kind: input, shape index: {}]
  %s1 = inlined_call_operand.hbm [shape: bf16[16,512], index: 1, kind: input, shape index: {}]
  %s2 = inlined_call_operand.hbm [shape: f32[1,512], index: 2, kind: input, shape index: {}]
  %s3 = inlined_call_operand.hbm [shape: bf16[512,512], index: 3, kind: input, shape index: {}]
  %s4 = inlined_call_operand.hbm [shape: f32[1,512], index: 4, kind: input, shape index: {}]
  %s5 = inlined_call_operand.hbm [shape: f32[2,512], index: 5, kind: output, shape index: {}]
  %s6 = sld [smem:[#allocation0]]
  $region66: #{tpu_custom_call.1} parent=0
    _
  %s8 = ssub.s32 1, %s6
  %s9 = scalar_select 0, %s8, %s6
  $region1: #{tpu_custom_call.1} parent=0
    #allocation3 [shape = 'u8[1024]{0}', space=vmem, size = 0x400, scoped, tag = 'input window, operand 0, single buffered']
    #allocation4 [shape = 's32[1]{0}', space=sflag, size = 0x4, scoped, tag = 'scoped memory for tpu_custom_call.1']
    #allocation5 [shape = 's32[1]{0}', space=sflag, size = 0x4, scoped, tag = 'scoped memory for tpu_custom_call.1']
    #allocation6 [shape = 'u8[16384]{0}', space=vmem, size = 0x4000, scoped, tag = 'input window, operand 1, single buffered']
    #allocation7 [shape = 's32[1]{0}', space=sflag, size = 0x4, scoped, tag = 'scoped memory for tpu_custom_call.1']
    #allocation8 [shape = 'u8[2048]{0}', space=vmem, size = 0x800, scoped, tag = 'input window, operand 2, single buffered']
    #allocation9 [shape = 'u8[524288]{0}', space=vmem, size = 0x80000, scoped, tag = 'input window, operand 3, single buffered']
    #allocation10 [shape = 's32[1]{0}', space=sflag, size = 0x4, scoped, tag = 'scoped memory for tpu_custom_call.1']
    #allocation11 [shape = 'u8[2048]{0}', space=vmem, size = 0x800, scoped, tag = 'input window, operand 4, single buffered']
    #allocation12 [shape = 'u8[4096]{0}', space=vmem, size = 0x1000, scoped, tag = 'output window, operand 0, single buffered']
    %10 = vsyncpa [#allocation4], 0
    %11 = vsyncpa [#allocation7], 0
    %12 = vsyncpa [#allocation10], 0
    %13 = vsyncpa [#allocation5], 0
    // Predicated region
    $region2: #{tpu_custom_call.1} parent=1 // pred_check
      _
    $region3: #{tpu_custom_call.1} parent=1 // pred_check_branch
      %15 = sbr.rel (0) target = $region5
    $region4: #{tpu_custom_call.1} parent=1 // pred_region
      %17 = vsyncadd [#allocation4], 0
      %s19 = sshll.u32 %s0, 4
      %s20 = int_to_ptr.hbm [resolvable:$true] %s19
      %s21 = sshll.u32 [#allocation3], 4
      %s22 = int_to_ptr.vmem [resolvable:$true] %s21
      %24 = dma.hbm_to_vmem [thread:$0]  %s20, 32, %s22, [#allocation4]
    $region5: #{tpu_custom_call.1} parent=1 // pred_fallthru
      _
    // Predicated region
    $region6: #{tpu_custom_call.1} parent=1 // pred_check
      _
    $region7: #{tpu_custom_call.1} parent=1 // pred_check_branch
      %26 = sbr.rel (0) target = $region9
    $region8: #{tpu_custom_call.1} parent=1 // pred_region
      %28 = vsyncadd [#allocation7], 0
      %s29 = sshll.u32 %s1, 4
      %s30 = int_to_ptr.hbm [resolvable:$true] %s29
      %s31 = sshll.u32 [#allocation6], 4
      %s32 = int_to_ptr.vmem [resolvable:$true] %s31
      %37 = dma.hbm_to_vmem [thread:$0]  %s30, 512, %s32, [#allocation7], 256, 256, 16
    $region9: #{tpu_custom_call.1} parent=1 // pred_fallthru
      _
    // Predicated region
    $region10: #{tpu_custom_call.1} parent=1 // pred_check
      _
    $region11: #{tpu_custom_call.1} parent=1 // pred_check_branch
      %39 = sbr.rel (0) target = $region13
    $region12: #{tpu_custom_call.1} parent=1 // pred_region
      %41 = vsyncadd [#allocation7], 0
      %s43 = sshll.u32 %s2, 4
      %s44 = int_to_ptr.hbm [resolvable:$true] %s43
      %s45 = sshll.u32 [#allocation8], 4
      %s46 = int_to_ptr.vmem [resolvable:$true] %s45
      %48 = dma.hbm_to_vmem [thread:$0]  %s44, 64, %s46, [#allocation7]
    $region13: #{tpu_custom_call.1} parent=1 // pred_fallthru
      _
    // Predicated region
    $region14: #{tpu_custom_call.1} parent=1 // pred_check
      _
    $region15: #{tpu_custom_call.1} parent=1 // pred_check_branch
      %50 = sbr.rel (0) target = $region17
    $region16: #{tpu_custom_call.1} parent=1 // pred_region
      %52 = vsyncadd [#allocation10], 0
      %s53 = sshll.u32 %s3, 4
      %s54 = int_to_ptr.hbm [resolvable:$true] %s53
      %s55 = sshll.u32 [#allocation9], 4
      %s56 = int_to_ptr.vmem [resolvable:$true] %s55
      %61 = dma.hbm_to_vmem [thread:$0]  %s54, 16384, %s56, [#allocation10], 256, 256, 16
    $region17: #{tpu_custom_call.1} parent=1 // pred_fallthru
      _
    // Predicated region
    $region18: #{tpu_custom_call.1} parent=1 // pred_check
      _
    $region19: #{tpu_custom_call.1} parent=1 // pred_check_branch
      %63 = sbr.rel (0) target = $region21
    $region20: #{tpu_custom_call.1} parent=1 // pred_region
      %65 = vsyncadd [#allocation10], 0
      %s67 = sshll.u32 %s4, 4
      %s68 = int_to_ptr.hbm [resolvable:$true] %s67
      %s69 = sshll.u32 [#allocation11], 4
      %s70 = int_to_ptr.vmem [resolvable:$true] %s69
      %72 = dma.hbm_to_vmem [thread:$0]  %s68, 64, %s70, [#allocation10]
    $region21: #{tpu_custom_call.1} parent=1 // pred_fallthru
      _
    // Predicated region
    $region22: #{tpu_custom_call.1} parent=1 // pred_check
      _
    $region23: #{tpu_custom_call.1} parent=1 // pred_check_branch
      %74 = sbr.rel (0) target = $region25
    $region24: #{tpu_custom_call.1} parent=1 // pred_region
      %76 = dma.done [#allocation4], 32
    $region25: #{tpu_custom_call.1} parent=1 // pred_fallthru
      _
    // Predicated region
    $region26: #{tpu_custom_call.1} parent=1 // pred_check
      _
    $region27: #{tpu_custom_call.1} parent=1 // pred_check_branch
      %78 = sbr.rel (0) target = $region29
    $region28: #{tpu_custom_call.1} parent=1 // pred_region
      %80 = dma.done [#allocation7], 512
    $region29: #{tpu_custom_call.1} parent=1 // pred_fallthru
      _
    // Predicated region
    $region30: #{tpu_custom_call.1} parent=1 // pred_check
      _
    $region31: #{tpu_custom_call.1} parent=1 // pred_check_branch
      %82 = sbr.rel (0) target = $region33
    $region32: #{tpu_custom_call.1} parent=1 // pred_region
      %84 = dma.done [#allocation7], 64
    $region33: #{tpu_custom_call.1} parent=1 // pred_fallthru
      _
    // Predicated region
    $region34: #{tpu_custom_call.1} parent=1 // pred_check
      _
    $region35: #{tpu_custom_call.1} parent=1 // pred_check_branch
      %86 = sbr.rel (0) target = $region37
    $region36: #{tpu_custom_call.1} parent=1 // pred_region
      %88 = dma.done [#allocation10], 16384
    $region37: #{tpu_custom_call.1} parent=1 // pred_fallthru
      _
    // Predicated region
    $region38: #{tpu_custom_call.1} parent=1 // pred_check
      _
    $region39: #{tpu_custom_call.1} parent=1 // pred_check_branch
      %90 = sbr.rel (0) target = $region41
    $region40: #{tpu_custom_call.1} parent=1 // pred_region
      %92 = dma.done [#allocation10], 64
    $region41: #{tpu_custom_call.1} parent=1 // pred_fallthru
      _
    %p94 = scmp.eq.s32.totalorder 0, 0
    // Predicated region
    $region42: #{tpu_custom_call.1} parent=1 // pred_check
      %p95 = pneg %p94
    $region43: #{tpu_custom_call.1} parent=1 // pred_check_branch
      %97 = sbr.rel (%p95) target = $region45
    $region44: #{tpu_custom_call.1} parent=1 // pred_region
      %v98 = vld [vmem:[#allocation3] sm:$0x3]
      %v99 = vpack.c.bf16 %v98, %v98
      %v100 = vld [vmem:[#allocation6] sm:$0xff]
      %v101 = vld [vmem:[#allocation6 + $0x8] sm:$0xff]
      %v102 = vld [vmem:[#allocation6 + $0x10] sm:$0xff]
      %v103 = vld [vmem:[#allocation6 + $0x18] sm:$0xff]
      %v104 = vld [vmem:[#allocation8] sm:$0xf]
      %v106 = vperm.slane %v104, 0
      %v107 = vperm.slane %v104, 1
      %v108 = vperm.slane %v104, 2
      %v109 = vperm.slane %v104, 3
      %v118 = vunpack.c.l.b16 %v100
      %v119 = vunpack.c.h.b16 %v100
      %v120 = vunpack.c.l.b16 %v101
      %v121 = vunpack.c.h.b16 %v101
      %v122 = vunpack.c.l.b16 %v102
      %v123 = vunpack.c.h.b16 %v102
      %v124 = vunpack.c.l.b16 %v103
      %v125 = vunpack.c.h.b16 %v103
      %v126 = vpack.c.b16 %v122, %v118
      %v127 = vpack.c.b16 %v123, %v119
      %v128 = vpack.c.b16 %v124, %v120
      %v129 = vpack.c.b16 %v125, %v121
      %vm134 = vcmask 130048
      %v136 = vsel %vm134, %v99, 0
      %138 = vmatpush.bf16.msra.mxu0 0
      %139 = vmatpush.bf16.msra.mxu0 0
      %140 = vmatpush.bf16.msra.mxu0 0
      %141 = vmatpush.bf16.msra.mxu0 0
      %142 = vmatpush.bf16.msra.mxu0 0
      %143 = vmatpush.bf16.msra.mxu0 0
      %144 = vmatpush.bf16.msra.mxu0 0
      %145 = vmatpush.bf16.msra.mxu0 %v126
      %146 = vmatmul.bf16.gmra.mxu0 %v136
      %v147 = vpop.f32.mrf.mxu0
      %v148 = vadd.f32 %v106, %v147
      %v149 = vpop.f32.mrf.mxu0
      %150 = vdwg.mxu0
      %151 = vmatpush.bf16.msra.mxu0 0
      %152 = vmatpush.bf16.msra.mxu0 0
      %153 = vmatpush.bf16.msra.mxu0 0
      %154 = vmatpush.bf16.msra.mxu0 0
      %155 = vmatpush.bf16.msra.mxu0 0
      %156 = vmatpush.bf16.msra.mxu0 0
      %157 = vmatpush.bf16.msra.mxu0 0
      %158 = vmatpush.bf16.msra.mxu0 %v127
      %159 = vmatmul.bf16.gmra.mxu0 %v136
      %v160 = vpop.f32.mrf.mxu0
      %v161 = vadd.f32 %v107, %v160
      %v162 = vpop.f32.mrf.mxu0
      %163 = vdwg.mxu0
      %164 = vmatpush.bf16.msra.mxu0 0
      %165 = vmatpush.bf16.msra.mxu0 0
      %166 = vmatpush.bf16.msra.mxu0 0
      %167 = vmatpush.bf16.msra.mxu0 0
      %168 = vmatpush.bf16.msra.mxu0 0
      %169 = vmatpush.bf16.msra.mxu0 0
      %170 = vmatpush.bf16.msra.mxu0 0
      %171 = vmatpush.bf16.msra.mxu0 %v128
      %172 = vmatmul.bf16.gmra.mxu0 %v136
      %v173 = vpop.f32.mrf.mxu0
      %v174 = vadd.f32 %v108, %v173
      %v175 = vpop.f32.mrf.mxu0
      %176 = vdwg.mxu0
      %177 = vmatpush.bf16.msra.mxu0 0
      %178 = vmatpush.bf16.msra.mxu0 0
      %179 = vmatpush.bf16.msra.mxu0 0
      %180 = vmatpush.bf16.msra.mxu0 0
      %181 = vmatpush.bf16.msra.mxu0 0
      %182 = vmatpush.bf16.msra.mxu0 0
      %183 = vmatpush.bf16.msra.mxu0 0
      %184 = vmatpush.bf16.msra.mxu0 %v129
      %185 = vmatmul.bf16.gmra.mxu0 %v136
      %v186 = vpop.f32.mrf.mxu0
      %v187 = vadd.f32 %v109, %v186
      %v188 = vpop.f32.mrf.mxu0
      %189 = vdwg.mxu0
      %v190 = vmax.f32 %v148, 0.0
      %v191 = vmax.f32 %v161, 0.0
      %v192 = vmax.f32 %v174, 0.0
      %v193 = vmax.f32 %v187, 0.0
      %v198 = vrot.slane %v191, 6
      %v199 = vrot.slane %v192, 4
      %v200 = vrot.slane %v193, 2
      %vm201 = vcmask 1041408
      %v202 = vsel %vm201, %v190, %v198
      %vm203 = vcmask 1045508
      %v204 = vsel %vm203, %v199, %v200
      %vm205 = vcmask 1043456
      %v206 = vsel %vm205, %v202, %v204
      %208 = vst [vmem:[#allocation2] sm:$0xff] %v206
    $region45: #{tpu_custom_call.1} parent=1 // pred_fallthru
      _
    %v209 = vld [vmem:[#allocation2] sm:$0xff]
    %211 = vst [vmem:[#allocation1] ss:$4 sm:$0xff] %v209
    %v212 = vld.sshfl [vmem:[#allocation1] sm:$0xff pattern:$0x73625140]
    %v213 = vld.sshfl [vmem:[#allocation1 + $0x8] sm:$0xff pattern:$0x73625140]
    %v214 = vld.sshfl [vmem:[#allocation1 + $0x10] sm:$0xff pattern:$0x73625140]
    %v215 = vld.sshfl [vmem:[#allocation1 + $0x18] sm:$0xff pattern:$0x73625140]
    %v220 = vpack.c.bf16 %v212, %v212
    %v221 = vpack.c.bf16 %v213, %v213
    %v222 = vpack.c.bf16 %v214, %v214
    %v223 = vpack.c.bf16 %v215, %v215
    %v224 = vld [vmem:[#allocation9] sm:$0xff]
    %v225 = vld [vmem:[#allocation9 + $0x8] sm:$0xff]
    %v226 = vld [vmem:[#allocation9 + $0x10] sm:$0xff]
    %v227 = vld [vmem:[#allocation9 + $0x18] sm:$0xff]
    %v228 = vld [vmem:[#allocation9 + $0x20] sm:$0xff]
    %v229 = vld [vmem:[#allocation9 + $0x28] sm:$0xff]
    %v230 = vld [vmem:[#allocation9 + $0x30] sm:$0xff]
    %v231 = vld [vmem:[#allocation9 + $0x38] sm:$0xff]
    %v232 = vld [vmem:[#allocation9 + $0x40] sm:$0xff]
    %v233 = vld [vmem:[#allocation9 + $0x48] sm:$0xff]
    %v234 = vld [vmem:[#allocation9 + $0x50] sm:$0xff]
    %v235 = vld [vmem:[#allocation9 + $0x58] sm:$0xff]
    %v236 = vld [vmem:[#allocation9 + $0x60] sm:$0xff]
    %v237 = vld [vmem:[#allocation9 + $0x68] sm:$0xff]
    %v238 = vld [vmem:[#allocation9 + $0x70] sm:$0xff]
    %v239 = vld [vmem:[#allocation9 + $0x78] sm:$0xff]
    %v240 = vld [vmem:[#allocation9 + $0x80] sm:$0xff]
    %v241 = vld [vmem:[#allocation9 + $0x88] sm:$0xff]
    %v242 = vld [vmem:[#allocation9 + $0x90] sm:$0xff]
    %v243 = vld [vmem:[#allocation9 + $0x98] sm:$0xff]
    %v244 = vld [vmem:[#allocation9 + $0xa0] sm:$0xff]
    %v245 = vld [vmem:[#allocation9 + $0xa8] sm:$0xff]
    %v246 = vld [vmem:[#allocation9 + $0xb0] sm:$0xff]
    %v247 = vld [vmem:[#allocation9 + $0xb8] sm:$0xff]
    %v248 = vld [vmem:[#allocation9 + $0xc0] sm:$0xff]
    %v249 = vld [vmem:[#allocation9 + $0xc8] sm:$0xff]
    %v250 = vld [vmem:[#allocation9 + $0xd0] sm:$0xff]
    %v251 = vld [vmem:[#allocation9 + $0xd8] sm:$0xff]
    %v252 = vld [vmem:[#allocation9 + $0xe0] sm:$0xff]
    %v253 = vld [vmem:[#allocation9 + $0xe8] sm:$0xff]
    %v254 = vld [vmem:[#allocation9 + $0xf0] sm:$0xff]
    %v255 = vld [vmem:[#allocation9 + $0xf8] sm:$0xff]
    %v256 = vld [vmem:[#allocation9 + $0x100] sm:$0xff]
    %v257 = vld [vmem:[#allocation9 + $0x108] sm:$0xff]
    %v258 = vld [vmem:[#allocation9 + $0x110] sm:$0xff]
    %v259 = vld [vmem:[#allocation9 + $0x118] sm:$0xff]
    %v260 = vld [vmem:[#allocation9 + $0x120] sm:$0xff]
    %v261 = vld [vmem:[#allocation9 + $0x128] sm:$0xff]
    %v262 = vld [vmem:[#allocation9 + $0x130] sm:$0xff]
    %v263 = vld [vmem:[#allocation9 + $0x138] sm:$0xff]
    %v264 = vld [vmem:[#allocation9 + $0x140] sm:$0xff]
    %v265 = vld [vmem:[#allocation9 + $0x148] sm:$0xff]
    %v266 = vld [vmem:[#allocation9 + $0x150] sm:$0xff]
    %v267 = vld [vmem:[#allocation9 + $0x158] sm:$0xff]
    %v268 = vld [vmem:[#allocation9 + $0x160] sm:$0xff]
    %v269 = vld [vmem:[#allocation9 + $0x168] sm:$0xff]
    %v270 = vld [vmem:[#allocation9 + $0x170] sm:$0xff]
    %v271 = vld [vmem:[#allocation9 + $0x178] sm:$0xff]
    %v272 = vld [vmem:[#allocation9 + $0x180] sm:$0xff]
    %v273 = vld [vmem:[#allocation9 + $0x188] sm:$0xff]
    %v274 = vld [vmem:[#allocation9 + $0x190] sm:$0xff]
    %v275 = vld [vmem:[#allocation9 + $0x198] sm:$0xff]
    %v276 = vld [vmem:[#allocation9 + $0x1a0] sm:$0xff]
    %v277 = vld [vmem:[#allocation9 + $0x1a8] sm:$0xff]
    %v278 = vld [vmem:[#allocation9 + $0x1b0] sm:$0xff]
    %v279 = vld [vmem:[#allocation9 + $0x1b8] sm:$0xff]
    %v280 = vld [vmem:[#allocation9 + $0x1c0] sm:$0xff]
    %v281 = vld [vmem:[#allocation9 + $0x1c8] sm:$0xff]
    %v282 = vld [vmem:[#allocation9 + $0x1d0] sm:$0xff]
    %v283 = vld [vmem:[#allocation9 + $0x1d8] sm:$0xff]
    %v284 = vld [vmem:[#allocation9 + $0x1e0] sm:$0xff]
    %v285 = vld [vmem:[#allocation9 + $0x1e8] sm:$0xff]
    %v286 = vld [vmem:[#allocation9 + $0x1f0] sm:$0xff]
    %v287 = vld [vmem:[#allocation9 + $0x1f8] sm:$0xff]
    %v288 = vld [vmem:[#allocation9 + $0x200] sm:$0xff]
    %v289 = vld [vmem:[#allocation9 + $0x208] sm:$0xff]
    %v290 = vld [vmem:[#allocation9 + $0x210] sm:$0xff]
    %v291 = vld [vmem:[#allocation9 + $0x218] sm:$0xff]
    %v292 = vld [vmem:[#allocation9 + $0x220] sm:$0xff]
    %v293 = vld [vmem:[#allocation9 + $0x228] sm:$0xff]
    %v294 = vld [vmem:[#allocation9 + $0x230] sm:$0xff]
    %v295 = vld [vmem:[#allocation9 + $0x238] sm:$0xff]
    %v296 = vld [vmem:[#allocation9 + $0x240] sm:$0xff]
    %v297 = vld [vmem:[#allocation9 + $0x248] sm:$0xff]
    %v298 = vld [vmem:[#allocation9 + $0x250] sm:$0xff]
    %v299 = vld [vmem:[#allocation9 + $0x258] sm:$0xff]
    %v300 = vld [vmem:[#allocation9 + $0x260] sm:$0xff]
    %v301 = vld [vmem:[#allocation9 + $0x268] sm:$0xff]
    %v302 = vld [vmem:[#allocation9 + $0x270] sm:$0xff]
    %v303 = vld [vmem:[#allocation9 + $0x278] sm:$0xff]
    %v304 = vld [vmem:[#allocation9 + $0x280] sm:$0xff]
    %v305 = vld [vmem:[#allocation9 + $0x288] sm:$0xff]
    %v306 = vld [vmem:[#allocation9 + $0x290] sm:$0xff]
    %v307 = vld [vmem:[#allocation9 + $0x298] sm:$0xff]
    %v308 = vld [vmem:[#allocation9 + $0x2a0] sm:$0xff]
    %v309 = vld [vmem:[#allocation9 + $0x2a8] sm:$0xff]
    %v310 = vld [vmem:[#allocation9 + $0x2b0] sm:$0xff]
    %v311 = vld [vmem:[#allocation9 + $0x2b8] sm:$0xff]
    %v312 = vld [vmem:[#allocation9 + $0x2c0] sm:$0xff]
    %v313 = vld [vmem:[#allocation9 + $0x2c8] sm:$0xff]
    %v314 = vld [vmem:[#allocation9 + $0x2d0] sm:$0xff]
    %v315 = vld [vmem:[#allocation9 + $0x2d8] sm:$0xff]
    %v316 = vld [vmem:[#allocation9 + $0x2e0] sm:$0xff]
    %v317 = vld [vmem:[#allocation9 + $0x2e8] sm:$0xff]
    %v318 = vld [vmem:[#allocation9 + $0x2f0] sm:$0xff]
    %v319 = vld [vmem:[#allocation9 + $0x2f8] sm:$0xff]
    %v320 = vld [vmem:[#allocation9 + $0x300] sm:$0xff]
    %v321 = vld [vmem:[#allocation9 + $0x308] sm:$0xff]
    %v322 = vld [vmem:[#allocation9 + $0x310] sm:$0xff]
    %v323 = vld [vmem:[#allocation9 + $0x318] sm:$0xff]
    %v324 = vld [vmem:[#allocation9 + $0x320] sm:$0xff]
    %v325 = vld [vmem:[#allocation9 + $0x328] sm:$0xff]
    %v326 = vld [vmem:[#allocation9 + $0x330] sm:$0xff]
    %v327 = vld [vmem:[#allocation9 + $0x338] sm:$0xff]
    %v328 = vld [vmem:[#allocation9 + $0x340] sm:$0xff]
    %v329 = vld [vmem:[#allocation9 + $0x348] sm:$0xff]
    %v330 = vld [vmem:[#allocation9 + $0x350] sm:$0xff]
    %v331 = vld [vmem:[#allocation9 + $0x358] sm:$0xff]
    %v332 = vld [vmem:[#allocation9 + $0x360] sm:$0xff]
    %v333 = vld [vmem:[#allocation9 + $0x368] sm:$0xff]
    %v334 = vld [vmem:[#allocation9 + $0x370] sm:$0xff]
    %v335 = vld [vmem:[#allocation9 + $0x378] sm:$0xff]
    %v336 = vld [vmem:[#allocation9 + $0x380] sm:$0xff]
    %v337 = vld [vmem:[#allocation9 + $0x388] sm:$0xff]
    %v338 = vld [vmem:[#allocation9 + $0x390] sm:$0xff]
    %v339 = vld [vmem:[#allocation9 + $0x398] sm:$0xff]
    %v340 = vld [vmem:[#allocation9 + $0x3a0] sm:$0xff]
    %v341 = vld [vmem:[#allocation9 + $0x3a8] sm:$0xff]
    %v342 = vld [vmem:[#allocation9 + $0x3b0] sm:$0xff]
    %v343 = vld [vmem:[#allocation9 + $0x3b8] sm:$0xff]
    %v344 = vld [vmem:[#allocation9 + $0x3c0] sm:$0xff]
    %v345 = vld [vmem:[#allocation9 + $0x3c8] sm:$0xff]
    %v346 = vld [vmem:[#allocation9 + $0x3d0] sm:$0xff]
    %v347 = vld [vmem:[#allocation9 + $0x3d8] sm:$0xff]
    %v348 = vld [vmem:[#allocation9 + $0x3e0] sm:$0xff]
    %v349 = vld [vmem:[#allocation9 + $0x3e8] sm:$0xff]
    %v350 = vld [vmem:[#allocation9 + $0x3f0] sm:$0xff]
    %v351 = vld [vmem:[#allocation9 + $0x3f8] sm:$0xff]
    %v480 = vunpack.c.l.b16 %v224
    %v481 = vunpack.c.h.b16 %v224
    %v482 = vunpack.c.l.b16 %v225
    %v483 = vunpack.c.h.b16 %v225
    %v484 = vunpack.c.l.b16 %v226
    %v485 = vunpack.c.h.b16 %v226
    %v486 = vunpack.c.l.b16 %v227
    %v487 = vunpack.c.h.b16 %v227
    %v488 = vunpack.c.l.b16 %v228
    %v489 = vunpack.c.h.b16 %v228
    %v490 = vunpack.c.l.b16 %v229
    %v491 = vunpack.c.h.b16 %v229
    %v492 = vunpack.c.l.b16 %v230
    %v493 = vunpack.c.h.b16 %v230
    %v494 = vunpack.c.l.b16 %v231
    %v495 = vunpack.c.h.b16 %v231
    %v496 = vunpack.c.l.b16 %v232
    %v497 = vunpack.c.h.b16 %v232
    %v498 = vunpack.c.l.b16 %v233
    %v499 = vunpack.c.h.b16 %v233
    %v500 = vunpack.c.l.b16 %v234
    %v501 = vunpack.c.h.b16 %v234
    %v502 = vunpack.c.l.b16 %v235
    %v503 = vunpack.c.h.b16 %v235
    %v504 = vunpack.c.l.b16 %v236
    %v505 = vunpack.c.h.b16 %v236
    %v506 = vunpack.c.l.b16 %v237
    %v507 = vunpack.c.h.b16 %v237
    %v508 = vunpack.c.l.b16 %v238
    %v509 = vunpack.c.h.b16 %v238
    %v510 = vunpack.c.l.b16 %v239
    %v511 = vunpack.c.h.b16 %v239
    %v512 = vunpack.c.l.b16 %v240
    %v513 = vunpack.c.h.b16 %v240
    %v514 = vunpack.c.l.b16 %v241
    %v515 = vunpack.c.h.b16 %v241
    %v516 = vunpack.c.l.b16 %v242
    %v517 = vunpack.c.h.b16 %v242
    %v518 = vunpack.c.l.b16 %v243
    %v519 = vunpack.c.h.b16 %v243
    %v520 = vunpack.c.l.b16 %v244
    %v521 = vunpack.c.h.b16 %v244
    %v522 = vunpack.c.l.b16 %v245
    %v523 = vunpack.c.h.b16 %v245
    %v524 = vunpack.c.l.b16 %v246
    %v525 = vunpack.c.h.b16 %v246
    %v526 = vunpack.c.l.b16 %v247
    %v527 = vunpack.c.h.b16 %v247
    %v528 = vunpack.c.l.b16 %v248
    %v529 = vunpack.c.h.b16 %v248
    %v530 = vunpack.c.l.b16 %v249
    %v531 = vunpack.c.h.b16 %v249
    %v532 = vunpack.c.l.b16 %v250
    %v533 = vunpack.c.h.b16 %v250
    %v534 = vunpack.c.l.b16 %v251
    %v535 = vunpack.c.h.b16 %v251
    %v536 = vunpack.c.l.b16 %v252
    %v537 = vunpack.c.h.b16 %v252
    %v538 = vunpack.c.l.b16 %v253
    %v539 = vunpack.c.h.b16 %v253
    %v540 = vunpack.c.l.b16 %v254
    %v541 = vunpack.c.h.b16 %v254
    %v542 = vunpack.c.l.b16 %v255
    %v543 = vunpack.c.h.b16 %v255
    %v544 = vunpack.c.l.b16 %v256
    %v545 = vunpack.c.h.b16 %v256
    %v546 = vunpack.c.l.b16 %v257
    %v547 = vunpack.c.h.b16 %v257
    %v548 = vunpack.c.l.b16 %v258
    %v549 = vunpack.c.h.b16 %v258
    %v550 = vunpack.c.l.b16 %v259
    %v551 = vunpack.c.h.b16 %v259
    %v552 = vunpack.c.l.b16 %v260
    %v553 = vunpack.c.h.b16 %v260
    %v554 = vunpack.c.l.b16 %v261
    %v555 = vunpack.c.h.b16 %v261
    %v556 = vunpack.c.l.b16 %v262
    %v557 = vunpack.c.h.b16 %v262
    %v558 = vunpack.c.l.b16 %v263
    %v559 = vunpack.c.h.b16 %v263
    %v560 = vunpack.c.l.b16 %v264
    %v561 = vunpack.c.h.b16 %v264
    %v562 = vunpack.c.l.b16 %v265
    %v563 = vunpack.c.h.b16 %v265
    %v564 = vunpack.c.l.b16 %v266
    %v565 = vunpack.c.h.b16 %v266
    %v566 = vunpack.c.l.b16 %v267
    %v567 = vunpack.c.h.b16 %v267
    %v568 = vunpack.c.l.b16 %v268
    %v569 = vunpack.c.h.b16 %v268
    %v570 = vunpack.c.l.b16 %v269
    %v571 = vunpack.c.h.b16 %v269
    %v572 = vunpack.c.l.b16 %v270
    %v573 = vunpack.c.h.b16 %v270
    %v574 = vunpack.c.l.b16 %v271
    %v575 = vunpack.c.h.b16 %v271
    %v576 = vunpack.c.l.b16 %v272
    %v577 = vunpack.c.h.b16 %v272
    %v578 = vunpack.c.l.b16 %v273
    %v579 = vunpack.c.h.b16 %v273
    %v580 = vunpack.c.l.b16 %v274
    %v581 = vunpack.c.h.b16 %v274
    %v582 = vunpack.c.l.b16 %v275
    %v583 = vunpack.c.h.b16 %v275
    %v584 = vunpack.c.l.b16 %v276
    %v585 = vunpack.c.h.b16 %v276
    %v586 = vunpack.c.l.b16 %v277
    %v587 = vunpack.c.h.b16 %v277
    %v588 = vunpack.c.l.b16 %v278
    %v589 = vunpack.c.h.b16 %v278
    %v590 = vunpack.c.l.b16 %v279
    %v591 = vunpack.c.h.b16 %v279
    %v592 = vunpack.c.l.b16 %v280
    %v593 = vunpack.c.h.b16 %v280
    %v594 = vunpack.c.l.b16 %v281
    %v595 = vunpack.c.h.b16 %v281
    %v596 = vunpack.c.l.b16 %v282
    %v597 = vunpack.c.h.b16 %v282
    %v598 = vunpack.c.l.b16 %v283
    %v599 = vunpack.c.h.b16 %v283
    %v600 = vunpack.c.l.b16 %v284
    %v601 = vunpack.c.h.b16 %v284
    %v602 = vunpack.c.l.b16 %v285
    %v603 = vunpack.c.h.b16 %v285
    %v604 = vunpack.c.l.b16 %v286
    %v605 = vunpack.c.h.b16 %v286
    %v606 = vunpack.c.l.b16 %v287
    %v607 = vunpack.c.h.b16 %v287
    %v608 = vunpack.c.l.b16 %v288
    %v609 = vunpack.c.h.b16 %v288
    %v610 = vunpack.c.l.b16 %v289
    %v611 = vunpack.c.h.b16 %v289
    %v612 = vunpack.c.l.b16 %v290
    %v613 = vunpack.c.h.b16 %v290
    %v614 = vunpack.c.l.b16 %v291
    %v615 = vunpack.c.h.b16 %v291
    %v616 = vunpack.c.l.b16 %v292
    %v617 = vunpack.c.h.b16 %v292
    %v618 = vunpack.c.l.b16 %v293
    %v619 = vunpack.c.h.b16 %v293
    %v620 = vunpack.c.l.b16 %v294
    %v621 = vunpack.c.h.b16 %v294
    %v622 = vunpack.c.l.b16 %v295
    %v623 = vunpack.c.h.b16 %v295
    %v624 = vunpack.c.l.b16 %v296
    %v625 = vunpack.c.h.b16 %v296
    %v626 = vunpack.c.l.b16 %v297
    %v627 = vunpack.c.h.b16 %v297
    %v628 = vunpack.c.l.b16 %v298
    %v629 = vunpack.c.h.b16 %v298
    %v630 = vunpack.c.l.b16 %v299
    %v631 = vunpack.c.h.b16 %v299
    %v632 = vunpack.c.l.b16 %v300
    %v633 = vunpack.c.h.b16 %v300
    %v634 = vunpack.c.l.b16 %v301
    %v635 = vunpack.c.h.b16 %v301
    %v636 = vunpack.c.l.b16 %v302
    %v637 = vunpack.c.h.b16 %v302
    %v638 = vunpack.c.l.b16 %v303
    %v639 = vunpack.c.h.b16 %v303
    %v640 = vunpack.c.l.b16 %v304
    %v641 = vunpack.c.h.b16 %v304
    %v642 = vunpack.c.l.b16 %v305
    %v643 = vunpack.c.h.b16 %v305
    %v644 = vunpack.c.l.b16 %v306
    %v645 = vunpack.c.h.b16 %v306
    %v646 = vunpack.c.l.b16 %v307
    %v647 = vunpack.c.h.b16 %v307
    %v648 = vunpack.c.l.b16 %v308
    %v649 = vunpack.c.h.b16 %v308
    %v650 = vunpack.c.l.b16 %v309
    %v651 = vunpack.c.h.b16 %v309
    %v652 = vunpack.c.l.b16 %v310
    %v653 = vunpack.c.h.b16 %v310
    %v654 = vunpack.c.l.b16 %v311
    %v655 = vunpack.c.h.b16 %v311
    %v656 = vunpack.c.l.b16 %v312
    %v657 = vunpack.c.h.b16 %v312
    %v658 = vunpack.c.l.b16 %v313
    %v659 = vunpack.c.h.b16 %v313
    %v660 = vunpack.c.l.b16 %v314
    %v661 = vunpack.c.h.b16 %v314
    %v662 = vunpack.c.l.b16 %v315
    %v663 = vunpack.c.h.b16 %v315
    %v664 = vunpack.c.l.b16 %v316
    %v665 = vunpack.c.h.b16 %v316
    %v666 = vunpack.c.l.b16 %v317
    %v667 = vunpack.c.h.b16 %v317
    %v668 = vunpack.c.l.b16 %v318
    %v669 = vunpack.c.h.b16 %v318
    %v670 = vunpack.c.l.b16 %v319
    %v671 = vunpack.c.h.b16 %v319
    %v672 = vunpack.c.l.b16 %v320
    %v673 = vunpack.c.h.b16 %v320
    %v674 = vunpack.c.l.b16 %v321
    %v675 = vunpack.c.h.b16 %v321
    %v676 = vunpack.c.l.b16 %v322
    %v677 = vunpack.c.h.b16 %v322
    %v678 = vunpack.c.l.b16 %v323
    %v679 = vunpack.c.h.b16 %v323
    %v680 = vunpack.c.l.b16 %v324
    %v681 = vunpack.c.h.b16 %v324
    %v682 = vunpack.c.l.b16 %v325
    %v683 = vunpack.c.h.b16 %v325
    %v684 = vunpack.c.l.b16 %v326
    %v685 = vunpack.c.h.b16 %v326
    %v686 = vunpack.c.l.b16 %v327
    %v687 = vunpack.c.h.b16 %v327
    %v688 = vunpack.c.l.b16 %v328
    %v689 = vunpack.c.h.b16 %v328
    %v690 = vunpack.c.l.b16 %v329
    %v691 = vunpack.c.h.b16 %v329
    %v692 = vunpack.c.l.b16 %v330
    %v693 = vunpack.c.h.b16 %v330
    %v694 = vunpack.c.l.b16 %v331
    %v695 = vunpack.c.h.b16 %v331
    %v696 = vunpack.c.l.b16 %v332
    %v697 = vunpack.c.h.b16 %v332
    %v698 = vunpack.c.l.b16 %v333
    %v699 = vunpack.c.h.b16 %v333
    %v700 = vunpack.c.l.b16 %v334
    %v701 = vunpack.c.h.b16 %v334
    %v702 = vunpack.c.l.b16 %v335
    %v703 = vunpack.c.h.b16 %v335
    %v704 = vunpack.c.l.b16 %v336
    %v705 = vunpack.c.h.b16 %v336
    %v706 = vunpack.c.l.b16 %v337
    %v707 = vunpack.c.h.b16 %v337
    %v708 = vunpack.c.l.b16 %v338
    %v709 = vunpack.c.h.b16 %v338
    %v710 = vunpack.c.l.b16 %v339
    %v711 = vunpack.c.h.b16 %v339
    %v712 = vunpack.c.l.b16 %v340
    %v713 = vunpack.c.h.b16 %v340
    %v714 = vunpack.c.l.b16 %v341
    %v715 = vunpack.c.h.b16 %v341
    %v716 = vunpack.c.l.b16 %v342
    %v717 = vunpack.c.h.b16 %v342
    %v718 = vunpack.c.l.b16 %v343
    %v719 = vunpack.c.h.b16 %v343
    %v720 = vunpack.c.l.b16 %v344
    %v721 = vunpack.c.h.b16 %v344
    %v722 = vunpack.c.l.b16 %v345
    %v723 = vunpack.c.h.b16 %v345
    %v724 = vunpack.c.l.b16 %v346
    %v725 = vunpack.c.h.b16 %v346
    %v726 = vunpack.c.l.b16 %v347
    %v727 = vunpack.c.h.b16 %v347
    %v728 = vunpack.c.l.b16 %v348
    %v729 = vunpack.c.h.b16 %v348
    %v730 = vunpack.c.l.b16 %v349
    %v731 = vunpack.c.h.b16 %v349
    %v732 = vunpack.c.l.b16 %v350
    %v733 = vunpack.c.h.b16 %v350
    %v734 = vunpack.c.l.b16 %v351
    %v735 = vunpack.c.h.b16 %v351
    %v736 = vpack.c.b16 %v484, %v480
    %v737 = vpack.c.b16 %v485, %v481
    %v738 = vpack.c.b16 %v486, %v482
    %v739 = vpack.c.b16 %v487, %v483
    %v740 = vpack.c.b16 %v492, %v488
    %v741 = vpack.c.b16 %v493, %v489
    %v742 = vpack.c.b16 %v494, %v490
    %v743 = vpack.c.b16 %v495, %v491
    %v744 = vpack.c.b16 %v500, %v496
    %v745 = vpack.c.b16 %v501, %v497
    %v746 = vpack.c.b16 %v502, %v498
    %v747 = vpack.c.b16 %v503, %v499
    %v748 = vpack.c.b16 %v508, %v504
    %v749 = vpack.c.b16 %v509, %v505
    %v750 = vpack.c.b16 %v510, %v506
    %v751 = vpack.c.b16 %v511, %v507
    %v752 = vpack.c.b16 %v516, %v512
    %v753 = vpack.c.b16 %v517, %v513
    %v754 = vpack.c.b16 %v518, %v514
    %v755 = vpack.c.b16 %v519, %v515
    %v756 = vpack.c.b16 %v524, %v520
    %v757 = vpack.c.b16 %v525, %v521
    %v758 = vpack.c.b16 %v526, %v522
    %v759 = vpack.c.b16 %v527, %v523
    %v760 = vpack.c.b16 %v532, %v528
    %v761 = vpack.c.b16 %v533, %v529
    %v762 = vpack.c.b16 %v534, %v530
    %v763 = vpack.c.b16 %v535, %v531
    %v764 = vpack.c.b16 %v540, %v536
    %v765 = vpack.c.b16 %v541, %v537
    %v766 = vpack.c.b16 %v542, %v538
    %v767 = vpack.c.b16 %v543, %v539
    %v768 = vpack.c.b16 %v548, %v544
    %v769 = vpack.c.b16 %v549, %v545
    %v770 = vpack.c.b16 %v550, %v546
    %v771 = vpack.c.b16 %v551, %v547
    %v772 = vpack.c.b16 %v556, %v552
    %v773 = vpack.c.b16 %v557, %v553
    %v774 = vpack.c.b16 %v558, %v554
    %v775 = vpack.c.b16 %v559, %v555
    %v776 = vpack.c.b16 %v564, %v560
    %v777 = vpack.c.b16 %v565, %v561
    %v778 = vpack.c.b16 %v566, %v562
    %v779 = vpack.c.b16 %v567, %v563
    %v780 = vpack.c.b16 %v572, %v568
    %v781 = vpack.c.b16 %v573, %v569
    %v782 = vpack.c.b16 %v574, %v570
    %v783 = vpack.c.b16 %v575, %v571
    %v784 = vpack.c.b16 %v580, %v576
    %v785 = vpack.c.b16 %v581, %v577
    %v786 = vpack.c.b16 %v582, %v578
    %v787 = vpack.c.b16 %v583, %v579
    %v788 = vpack.c.b16 %v588, %v584
    %v789 = vpack.c.b16 %v589, %v585
    %v790 = vpack.c.b16 %v590, %v586
    %v791 = vpack.c.b16 %v591, %v587
    %v792 = vpack.c.b16 %v596, %v592
    %v793 = vpack.c.b16 %v597, %v593
    %v794 = vpack.c.b16 %v598, %v594
    %v795 = vpack.c.b16 %v599, %v595
    %v796 = vpack.c.b16 %v604, %v600
    %v797 = vpack.c.b16 %v605, %v601
    %v798 = vpack.c.b16 %v606, %v602
    %v799 = vpack.c.b16 %v607, %v603
    %v800 = vpack.c.b16 %v612, %v608
    %v801 = vpack.c.b16 %v613, %v609
    %v802 = vpack.c.b16 %v614, %v610
    %v803 = vpack.c.b16 %v615, %v611
    %v804 = vpack.c.b16 %v620, %v616
    %v805 = vpack.c.b16 %v621, %v617
    %v806 = vpack.c.b16 %v622, %v618
    %v807 = vpack.c.b16 %v623, %v619
    %v808 = vpack.c.b16 %v628, %v624
    %v809 = vpack.c.b16 %v629, %v625
    %v810 = vpack.c.b16 %v630, %v626
    %v811 = vpack.c.b16 %v631, %v627
    %v812 = vpack.c.b16 %v636, %v632
    %v813 = vpack.c.b16 %v637, %v633
    %v814 = vpack.c.b16 %v638, %v634
    %v815 = vpack.c.b16 %v639, %v635
    %v816 = vpack.c.b16 %v644, %v640
    %v817 = vpack.c.b16 %v645, %v641
    %v818 = vpack.c.b16 %v646, %v642
    %v819 = vpack.c.b16 %v647, %v643
    %v820 = vpack.c.b16 %v652, %v648
    %v821 = vpack.c.b16 %v653, %v649
    %v822 = vpack.c.b16 %v654, %v650
    %v823 = vpack.c.b16 %v655, %v651
    %v824 = vpack.c.b16 %v660, %v656
    %v825 = vpack.c.b16 %v661, %v657
    %v826 = vpack.c.b16 %v662, %v658
    %v827 = vpack.c.b16 %v663, %v659
    %v828 = vpack.c.b16 %v668, %v664
    %v829 = vpack.c.b16 %v669, %v665
    %v830 = vpack.c.b16 %v670, %v666
    %v831 = vpack.c.b16 %v671, %v667
    %v832 = vpack.c.b16 %v676, %v672
    %v833 = vpack.c.b16 %v677, %v673
    %v834 = vpack.c.b16 %v678, %v674
    %v835 = vpack.c.b16 %v679, %v675
    %v836 = vpack.c.b16 %v684, %v680
    %v837 = vpack.c.b16 %v685, %v681
    %v838 = vpack.c.b16 %v686, %v682
    %v839 = vpack.c.b16 %v687, %v683
    %v840 = vpack.c.b16 %v692, %v688
    %v841 = vpack.c.b16 %v693, %v689
    %v842 = vpack.c.b16 %v694, %v690
    %v843 = vpack.c.b16 %v695, %v691
    %v844 = vpack.c.b16 %v700, %v696
    %v845 = vpack.c.b16 %v701, %v697
    %v846 = vpack.c.b16 %v702, %v698
    %v847 = vpack.c.b16 %v703, %v699
    %v848 = vpack.c.b16 %v708, %v704
    %v849 = vpack.c.b16 %v709, %v705
    %v850 = vpack.c.b16 %v710, %v706
    %v851 = vpack.c.b16 %v711, %v707
    %v852 = vpack.c.b16 %v716, %v712
    %v853 = vpack.c.b16 %v717, %v713
    %v854 = vpack.c.b16 %v718, %v714
    %v855 = vpack.c.b16 %v719, %v715
    %v856 = vpack.c.b16 %v724, %v720
    %v857 = vpack.c.b16 %v725, %v721
    %v858 = vpack.c.b16 %v726, %v722
    %v859 = vpack.c.b16 %v727, %v723
    %v860 = vpack.c.b16 %v732, %v728
    %v861 = vpack.c.b16 %v733, %v729
    %v862 = vpack.c.b16 %v734, %v730
    %v863 = vpack.c.b16 %v735, %v731
    %992 = vmatpush.bf16.msra.mxu0 %v764
    %993 = vmatpush.bf16.msra.mxu0 %v760
    %994 = vmatpush.bf16.msra.mxu0 %v756
    %995 = vmatpush.bf16.msra.mxu0 %v752
    %996 = vmatpush.bf16.msra.mxu0 %v748
    %997 = vmatpush.bf16.msra.mxu0 %v744
    %998 = vmatpush.bf16.msra.mxu0 %v740
    %999 = vmatpush.bf16.msra.mxu0 %v736
    %1000 = vmatmul.bf16.gmra.mxu0 %v220
    %v1001 = vpop.f32.mrf.mxu0
    %v1002 = vadd.f32 0.0, %v1001
    %v1003 = vpop.f32.mrf.mxu0
    %1004 = vdwg.mxu0
    %1005 = vmatpush.bf16.msra.mxu0 %v796
    %1006 = vmatpush.bf16.msra.mxu0 %v792
    %1007 = vmatpush.bf16.msra.mxu0 %v788
    %1008 = vmatpush.bf16.msra.mxu0 %v784
    %1009 = vmatpush.bf16.msra.mxu0 %v780
    %1010 = vmatpush.bf16.msra.mxu0 %v776
    %1011 = vmatpush.bf16.msra.mxu0 %v772
    %1012 = vmatpush.bf16.msra.mxu0 %v768
    %1013 = vmatmul.bf16.gmra.mxu0 %v221
    %v1014 = vpop.f32.mrf.mxu0
    %v1015 = vadd.f32 %v1002, %v1014
    %v1016 = vpop.f32.mrf.mxu0
    %1017 = vdwg.mxu0
    %1018 = vmatpush.bf16.msra.mxu0 %v828
    %1019 = vmatpush.bf16.msra.mxu0 %v824
    %1020 = vmatpush.bf16.msra.mxu0 %v820
    %1021 = vmatpush.bf16.msra.mxu0 %v816
    %1022 = vmatpush.bf16.msra.mxu0 %v812
    %1023 = vmatpush.bf16.msra.mxu0 %v808
    %1024 = vmatpush.bf16.msra.mxu0 %v804
    %1025 = vmatpush.bf16.msra.mxu0 %v800
    %1026 = vmatmul.bf16.gmra.mxu0 %v222
    %v1027 = vpop.f32.mrf.mxu0
    %v1028 = vadd.f32 %v1015, %v1027
    %v1029 = vpop.f32.mrf.mxu0
    %1030 = vdwg.mxu0
    %1031 = vmatpush.bf16.msra.mxu0 %v860
    %1032 = vmatpush.bf16.msra.mxu0 %v856
    %1033 = vmatpush.bf16.msra.mxu0 %v852
    %1034 = vmatpush.bf16.msra.mxu0 %v848
    %1035 = vmatpush.bf16.msra.mxu0 %v844
    %1036 = vmatpush.bf16.msra.mxu0 %v840
    %1037 = vmatpush.bf16.msra.mxu0 %v836
    %1038 = vmatpush.bf16.msra.mxu0 %v832
    %1039 = vmatmul.bf16.gmra.mxu0 %v223
    %v1040 = vpop.f32.mrf.mxu0
    %v1041 = vadd.f32 %v1028, %v1040
    %v1042 = vpop.f32.mrf.mxu0
    %1043 = vdwg.mxu0
    %1044 = vmatpush.bf16.msra.mxu0 %v765
    %1045 = vmatpush.bf16.msra.mxu0 %v761
    %1046 = vmatpush.bf16.msra.mxu0 %v757
    %1047 = vmatpush.bf16.msra.mxu0 %v753
    %1048 = vmatpush.bf16.msra.mxu0 %v749
    %1049 = vmatpush.bf16.msra.mxu0 %v745
    %1050 = vmatpush.bf16.msra.mxu0 %v741
    %1051 = vmatpush.bf16.msra.mxu0 %v737
    %1052 = vmatmul.bf16.gmra.mxu0 %v220
    %v1053 = vpop.f32.mrf.mxu0
    %v1054 = vadd.f32 0.0, %v1053
    %v1055 = vpop.f32.mrf.mxu0
    %1056 = vdwg.mxu0
    %1057 = vmatpush.bf16.msra.mxu0 %v797
    %1058 = vmatpush.bf16.msra.mxu0 %v793
    %1059 = vmatpush.bf16.msra.mxu0 %v789
    %1060 = vmatpush.bf16.msra.mxu0 %v785
    %1061 = vmatpush.bf16.msra.mxu0 %v781
    %1062 = vmatpush.bf16.msra.mxu0 %v777
    %1063 = vmatpush.bf16.msra.mxu0 %v773
    %1064 = vmatpush.bf16.msra.mxu0 %v769
    %1065 = vmatmul.bf16.gmra.mxu0 %v221
    %v1066 = vpop.f32.mrf.mxu0
    %v1067 = vadd.f32 %v1054, %v1066
    %v1068 = vpop.f32.mrf.mxu0
    %1069 = vdwg.mxu0
    %1070 = vmatpush.bf16.msra.mxu0 %v829
    %1071 = vmatpush.bf16.msra.mxu0 %v825
    %1072 = vmatpush.bf16.msra.mxu0 %v821
    %1073 = vmatpush.bf16.msra.mxu0 %v817
    %1074 = vmatpush.bf16.msra.mxu0 %v813
    %1075 = vmatpush.bf16.msra.mxu0 %v809
    %1076 = vmatpush.bf16.msra.mxu0 %v805
    %1077 = vmatpush.bf16.msra.mxu0 %v801
    %1078 = vmatmul.bf16.gmra.mxu0 %v222
    %v1079 = vpop.f32.mrf.mxu0
    %v1080 = vadd.f32 %v1067, %v1079
    %v1081 = vpop.f32.mrf.mxu0
    %1082 = vdwg.mxu0
    %1083 = vmatpush.bf16.msra.mxu0 %v861
    %1084 = vmatpush.bf16.msra.mxu0 %v857
    %1085 = vmatpush.bf16.msra.mxu0 %v853
    %1086 = vmatpush.bf16.msra.mxu0 %v849
    %1087 = vmatpush.bf16.msra.mxu0 %v845
    %1088 = vmatpush.bf16.msra.mxu0 %v841
    %1089 = vmatpush.bf16.msra.mxu0 %v837
    %1090 = vmatpush.bf16.msra.mxu0 %v833
    %1091 = vmatmul.bf16.gmra.mxu0 %v223
    %v1092 = vpop.f32.mrf.mxu0
    %v1093 = vadd.f32 %v1080, %v1092
    %v1094 = vpop.f32.mrf.mxu0
    %1095 = vdwg.mxu0
    %1096 = vmatpush.bf16.msra.mxu0 %v766
    %1097 = vmatpush.bf16.msra.mxu0 %v762
    %1098 = vmatpush.bf16.msra.mxu0 %v758
    %1099 = vmatpush.bf16.msra.mxu0 %v754
    %1100 = vmatpush.bf16.msra.mxu0 %v750
    %1101 = vmatpush.bf16.msra.mxu0 %v746
    %1102 = vmatpush.bf16.msra.mxu0 %v742
    %1103 = vmatpush.bf16.msra.mxu0 %v738
    %1104 = vmatmul.bf16.gmra.mxu0 %v220
    %v1105 = vpop.f32.mrf.mxu0
    %v1106 = vadd.f32 0.0, %v1105
    %v1107 = vpop.f32.mrf.mxu0
    %1108 = vdwg.mxu0
    %1109 = vmatpush.bf16.msra.mxu0 %v798
    %1110 = vmatpush.bf16.msra.mxu0 %v794
    %1111 = vmatpush.bf16.msra.mxu0 %v790
    %1112 = vmatpush.bf16.msra.mxu0 %v786
    %1113 = vmatpush.bf16.msra.mxu0 %v782
    %1114 = vmatpush.bf16.msra.mxu0 %v778
    %1115 = vmatpush.bf16.msra.mxu0 %v774
    %1116 = vmatpush.bf16.msra.mxu0 %v770
    %1117 = vmatmul.bf16.gmra.mxu0 %v221
    %v1118 = vpop.f32.mrf.mxu0
    %v1119 = vadd.f32 %v1106, %v1118
    %v1120 = vpop.f32.mrf.mxu0
    %1121 = vdwg.mxu0
    %1122 = vmatpush.bf16.msra.mxu0 %v830
    %1123 = vmatpush.bf16.msra.mxu0 %v826
    %1124 = vmatpush.bf16.msra.mxu0 %v822
    %1125 = vmatpush.bf16.msra.mxu0 %v818
    %1126 = vmatpush.bf16.msra.mxu0 %v814
    %1127 = vmatpush.bf16.msra.mxu0 %v810
    %1128 = vmatpush.bf16.msra.mxu0 %v806
    %1129 = vmatpush.bf16.msra.mxu0 %v802
    %1130 = vmatmul.bf16.gmra.mxu0 %v222
    %v1131 = vpop.f32.mrf.mxu0
    %v1132 = vadd.f32 %v1119, %v1131
    %v1133 = vpop.f32.mrf.mxu0
    %1134 = vdwg.mxu0
    %1135 = vmatpush.bf16.msra.mxu0 %v862
    %1136 = vmatpush.bf16.msra.mxu0 %v858
    %1137 = vmatpush.bf16.msra.mxu0 %v854
    %1138 = vmatpush.bf16.msra.mxu0 %v850
    %1139 = vmatpush.bf16.msra.mxu0 %v846
    %1140 = vmatpush.bf16.msra.mxu0 %v842
    %1141 = vmatpush.bf16.msra.mxu0 %v838
    %1142 = vmatpush.bf16.msra.mxu0 %v834
    %1143 = vmatmul.bf16.gmra.mxu0 %v223
    %v1144 = vpop.f32.mrf.mxu0
    %v1145 = vadd.f32 %v1132, %v1144
    %v1146 = vpop.f32.mrf.mxu0
    %1147 = vdwg.mxu0
    %1148 = vmatpush.bf16.msra.mxu0 %v767
    %1149 = vmatpush.bf16.msra.mxu0 %v763
    %1150 = vmatpush.bf16.msra.mxu0 %v759
    %1151 = vmatpush.bf16.msra.mxu0 %v755
    %1152 = vmatpush.bf16.msra.mxu0 %v751
    %1153 = vmatpush.bf16.msra.mxu0 %v747
    %1154 = vmatpush.bf16.msra.mxu0 %v743
    %1155 = vmatpush.bf16.msra.mxu0 %v739
    %1156 = vmatmul.bf16.gmra.mxu0 %v220
    %v1157 = vpop.f32.mrf.mxu0
    %v1158 = vadd.f32 0.0, %v1157
    %v1159 = vpop.f32.mrf.mxu0
    %1160 = vdwg.mxu0
    %1161 = vmatpush.bf16.msra.mxu0 %v799
    %1162 = vmatpush.bf16.msra.mxu0 %v795
    %1163 = vmatpush.bf16.msra.mxu0 %v791
    %1164 = vmatpush.bf16.msra.mxu0 %v787
    %1165 = vmatpush.bf16.msra.mxu0 %v783
    %1166 = vmatpush.bf16.msra.mxu0 %v779
    %1167 = vmatpush.bf16.msra.mxu0 %v775
    %1168 = vmatpush.bf16.msra.mxu0 %v771
    %1169 = vmatmul.bf16.gmra.mxu0 %v221
    %v1170 = vpop.f32.mrf.mxu0
    %v1171 = vadd.f32 %v1158, %v1170
    %v1172 = vpop.f32.mrf.mxu0
    %1173 = vdwg.mxu0
    %1174 = vmatpush.bf16.msra.mxu0 %v831
    %1175 = vmatpush.bf16.msra.mxu0 %v827
    %1176 = vmatpush.bf16.msra.mxu0 %v823
    %1177 = vmatpush.bf16.msra.mxu0 %v819
    %1178 = vmatpush.bf16.msra.mxu0 %v815
    %1179 = vmatpush.bf16.msra.mxu0 %v811
    %1180 = vmatpush.bf16.msra.mxu0 %v807
    %1181 = vmatpush.bf16.msra.mxu0 %v803
    %1182 = vmatmul.bf16.gmra.mxu0 %v222
    %v1183 = vpop.f32.mrf.mxu0
    %v1184 = vadd.f32 %v1171, %v1183
    %v1185 = vpop.f32.mrf.mxu0
    %1186 = vdwg.mxu0
    %1187 = vmatpush.bf16.msra.mxu0 %v863
    %1188 = vmatpush.bf16.msra.mxu0 %v859
    %1189 = vmatpush.bf16.msra.mxu0 %v855
    %1190 = vmatpush.bf16.msra.mxu0 %v851
    %1191 = vmatpush.bf16.msra.mxu0 %v847
    %1192 = vmatpush.bf16.msra.mxu0 %v843
    %1193 = vmatpush.bf16.msra.mxu0 %v839
    %1194 = vmatpush.bf16.msra.mxu0 %v835
    %1195 = vmatmul.bf16.gmra.mxu0 %v223
    %v1196 = vpop.f32.mrf.mxu0
    %v1197 = vadd.f32 %v1184, %v1196
    %v1198 = vpop.f32.mrf.mxu0
    %1199 = vdwg.mxu0
    %s1200 = smul.u32 0, 512
    %p1201 = scmp.eq.s32.totalorder 0, 0
    // Predicated region
    $region46: #{tpu_custom_call.1} parent=1 // pred_check
      %p1202 = pneg %p1201
    $region47: #{tpu_custom_call.1} parent=1 // pred_check_branch
      %1204 = sbr.rel (%p1202) target = $region49
    $region48: #{tpu_custom_call.1} parent=1 // pred_region
      %v1209 = vrot.slane %v1093, 6
      %v1210 = vrot.slane %v1145, 4
      %v1211 = vrot.slane %v1197, 2
      %vm1212 = vcmask 1041408
      %v1213 = vsel %vm1212, %v1041, %v1209
      %vm1214 = vcmask 1045508
      %v1215 = vsel %vm1214, %v1210, %v1211
      %vm1216 = vcmask 1043456
      %v1217 = vsel %vm1216, %v1213, %v1215
      %s1219 = sshra.s32 %s1200, 7
      %s1220 = sand.u32 %s1200, 127
      %s1221 = smul.addr %s1219, 2
      %s1222 = scalar_lea.vmem [#allocation12], %s1221
      %1223 = vst [vmem:[%s1222] sm:$0xff] %v1217
    $region49: #{tpu_custom_call.1} parent=1 // pred_fallthru
      _
    %p1224 = scmp.gt.s32.totalorder 0, 0
    // Predicated region
    $region50: #{tpu_custom_call.1} parent=1 // pred_check
      %p1225 = pneg %p1224
    $region51: #{tpu_custom_call.1} parent=1 // pred_check_branch
      %1227 = sbr.rel (%p1225) target = $region53
    $region52: #{tpu_custom_call.1} parent=1 // pred_region
      %s1228 = sshra.s32 %s1200, 7
      %s1229 = sand.u32 %s1200, 127
      %s1230 = smul.addr %s1228, 2
      %s1231 = scalar_lea.vmem [#allocation12], %s1230
      %v1232 = vld [vmem:[%s1231] sm:$0xff]
      %v1237 = vrot.slane %v1093, 6
      %v1238 = vrot.slane %v1145, 4
      %v1239 = vrot.slane %v1197, 2
      %vm1240 = vcmask 1041408
      %v1241 = vsel %vm1240, %v1041, %v1237
      %vm1242 = vcmask 1045508
      %v1243 = vsel %vm1242, %v1238, %v1239
      %vm1244 = vcmask 1043456
      %v1245 = vsel %vm1244, %v1241, %v1243
      %v1247 = vadd.f32 %v1232, %v1245
      %1248 = vst [vmem:[%s1231] sm:$0xff] %v1247
    $region53: #{tpu_custom_call.1} parent=1 // pred_fallthru
      _
    // Predicated region
    $region54: #{tpu_custom_call.1} parent=1 // pred_check
      %p1249 = pneg %p1201
    $region55: #{tpu_custom_call.1} parent=1 // pred_check_branch
      %1251 = sbr.rel (%p1249) target = $region57
    $region56: #{tpu_custom_call.1} parent=1 // pred_region
      %s1252 = sshra.s32 %s1200, 7
      %s1253 = sand.u32 %s1200, 127
      %s1254 = smul.addr %s1252, 2
      %s1255 = scalar_lea.vmem [#allocation12], %s1254
      %v1256 = vld [vmem:[%s1255] sm:$0xff]
      %s1257 = scalar_lea.vmem [#allocation11], %s1252
      %v1258 = vld [vmem:[%s1257] sm:$0xf]
      %v1260 = vperm.slane %v1258, 0
      %v1261 = vperm.slane %v1258, 1
      %v1262 = vperm.slane %v1258, 2
      %v1263 = vperm.slane %v1258, 3
      %v1264 = vrot.slane %v1261, 6
      %v1265 = vrot.slane %v1262, 4
      %v1266 = vrot.slane %v1263, 2
      %vm1267 = vcmask 1041408
      %v1268 = vsel %vm1267, %v1260, %v1264
      %vm1269 = vcmask 1045508
      %v1270 = vsel %vm1269, %v1265, %v1266
      %vm1271 = vcmask 1043456
      %v1272 = vsel %vm1271, %v1268, %v1270
      %v1274 = vadd.f32 %v1256, %v1272
      %1275 = vst [vmem:[%s1255] sm:$0xff] %v1274
    $region57: #{tpu_custom_call.1} parent=1 // pred_fallthru
      _
    // Predicated region
    $region58: #{tpu_custom_call.1} parent=1 // pred_check
      _
    $region59: #{tpu_custom_call.1} parent=1 // pred_check_branch
      %1277 = sbr.rel (0) target = $region61
    $region60: #{tpu_custom_call.1} parent=1 // pred_region
      %1279 = vsyncadd [#allocation5], 0
      %s1281 = sshll.u32 [#allocation12], 4
      %s1282 = int_to_ptr.vmem [resolvable:$true] %s1281
      %s1283 = sshll.u32 %s5, 4
      %s1284 = int_to_ptr.hbm [resolvable:$true] %s1283
      %1286 = dma.vmem_to_hbm [thread:$0]  %s1282, 128, %s1284, [#allocation5]
    $region61: #{tpu_custom_call.1} parent=1 // pred_fallthru
      _
    // Predicated region
    $region62: #{tpu_custom_call.1} parent=1 // pred_check
      _
    $region63: #{tpu_custom_call.1} parent=1 // pred_check_branch
      %1288 = sbr.rel (0) target = $region65
    $region64: #{tpu_custom_call.1} parent=1 // pred_region
      %1290 = dma.done [#allocation5], 128
    $region65: #{tpu_custom_call.1} parent=1 // pred_fallthru
      _
    %1291 = vsyncpa [#allocation4], 1
    %1292 = vsyncpa [#allocation7], 1
    %1293 = vsyncpa [#allocation10], 1
    %1294 = vsyncpa [#allocation5], 1

</llo_original>
